<compile_context>
chip_gen: v6e
topology: v6e:2x2x1
jax: 0.10.0
libtpu: 0.0.40
codegen_flags: <defaults>
</compile_context>

<pallas_src>
import jax
import jax.numpy as jnp
from jax.experimental import pallas as pl
from jax.experimental.pallas import tpu as pltpu


# ---------------------------------------------------------------------------
# Kernel
# ---------------------------------------------------------------------------
def _make_mlp_kernel(num_layers: int):
    """Kernel body for `num_layers` chained Linear layers (one batch tile)."""

    def kernel(*refs):
        # refs = (x_ref, w0, b0, w1, b1, ..., o_ref)
        x_ref = refs[0]
        o_ref = refs[-1]
        params = refs[1:-1]

        in_dtype = x_ref.dtype
        h = x_ref[...]                                   # native dtype -> MXU
        for i in range(num_layers):
            w = params[2 * i][...]                       # [in_i, out_i]
            b = params[2 * i + 1][...]                   # [1,   out_i]
            acc = jnp.dot(h, w, preferred_element_type=jnp.float32)
            acc = acc + b.astype(jnp.float32)            # bias add in f32
            # Cast intermediate back to the layer I/O dtype (no-op for f32),
            # matching layer-by-layer PyTorch semantics.
            h = acc if i == num_layers - 1 else acc.astype(in_dtype)
        o_ref[...] = h.astype(o_ref.dtype)

    return kernel


# ---------------------------------------------------------------------------
# Wrapper
# ---------------------------------------------------------------------------
def _round_up(n: int, m: int) -> int:
    return ((n + m - 1) // m) * m


def mlp_forward(x, weights, biases, *, block_batch: int = 256, lane: int = 128):
    """Fused MLP forward.

    Args:
      x:        [batch, input_size]
      weights:  list of [in_i, out_i] arrays ([in, out] = transpose of PyTorch)
      biases:   list of [out_i] arrays
      block_batch: max rows per batch tile (rounded to a multiple of 8)
      lane:     feature padding granularity (128 = vreg lane width)
    Returns:
      [batch, output_size]
    """
    num_layers = len(weights)
    assert len(biases) == num_layers
    batch, in_size = x.shape
    out_size = weights[-1].shape[1]

    # ---- pad feature dims to lane multiples (exact for chained Linear) ----
    dims = [weights[0].shape[0]] + [w.shape[1] for w in weights]
    dims_pad = [_round_up(d, lane) for d in dims]

    w_pad, b_pad = [], []
    for i, (w, b) in enumerate(zip(weights, biases)):
        wp = jnp.zeros((dims_pad[i], dims_pad[i + 1]), w.dtype)
        wp = wp.at[: w.shape[0], : w.shape[1]].set(w)
        bp = jnp.zeros((1, dims_pad[i + 1]), b.dtype)
        bp = bp.at[0, : b.shape[0]].set(b)
        w_pad.append(wp)
        b_pad.append(bp)

    # ---- pad batch to a multiple of the batch tile (tile multiple of 8) ----
    tb = min(_round_up(block_batch, 8), _round_up(batch, 8))
    batch_pad = _round_up(batch, tb)
    x_pad = jnp.zeros((batch_pad, dims_pad[0]), x.dtype)
    x_pad = x_pad.at[:batch, :in_size].set(x)

    grid = (batch_pad // tb,)

    # ---- operands + BlockSpecs ----
    params = []
    for w, b in zip(w_pad, b_pad):
        params.append(w)
        params.append(b)
    operands = [x_pad] + params

    in_specs = [pl.BlockSpec((tb, dims_pad[0]), lambda i: (i, 0))]
    for p in params:
        # Constant index_map -> weight/bias tile stays resident across the grid.
        in_specs.append(pl.BlockSpec(p.shape, lambda i: (0, 0)))
    out_spec = pl.BlockSpec((tb, dims_pad[-1]), lambda i: (i, 0))

    # ---- scheduling hints ----
    itemsize = jnp.dtype(x.dtype).itemsize
    flops = 2 * batch_pad * sum(int(w.shape[0]) * int(w.shape[1]) for w in w_pad)
    bytes_accessed = (
        x_pad.size * itemsize
        + sum(p.size * jnp.dtype(p.dtype).itemsize for p in params)
        + batch_pad * dims_pad[-1] * itemsize
    )
    cost = pl.CostEstimate(flops=flops, transcendentals=0,
                           bytes_accessed=bytes_accessed)

    param_bytes = sum(p.size * jnp.dtype(p.dtype).itemsize for p in params)
    tile_bytes = tb * (dims_pad[0] + dims_pad[-1]) * itemsize      # x + out tile
    act_bytes = 2 * tb * max(dims_pad) * 4                          # f32 intermediates
    vmem_budget = 2 * (param_bytes + tile_bytes) + act_bytes + (4 << 20)
    vmem_limit = int(min(max(vmem_budget, 32 << 20), 64 << 20))

    kernel = _make_mlp_kernel(num_layers)

    out_pad = pl.pallas_call(
        kernel,
        out_shape=jax.ShapeDtypeStruct((batch_pad, dims_pad[-1]), x.dtype),
        grid_spec=pltpu.PrefetchScalarGridSpec(
            num_scalar_prefetch=0,
            grid=grid,
            in_specs=in_specs,
            out_specs=out_spec,
        ),
        compiler_params=pltpu.CompilerParams(
            dimension_semantics=("parallel",),
            vmem_limit_bytes=vmem_limit,
        ),
        cost_estimate=cost,
    )(*operands)

    return out_pad[:batch, :out_size]


# ---------------------------------------------------------------------------
# Params init (mirrors MLP.__init__ layer shapes) + reference
# ---------------------------------------------------------------------------
def init_mlp_params(key, input_size, hidden_size, num_hidden_layers, output_size,
                    dtype=jnp.float32):
    if num_hidden_layers == 0:
        layer_dims = [(input_size, output_size)]
    else:
        layer_dims = [(input_size, hidden_size)]
        for _ in range(num_hidden_layers - 1):
            layer_dims.append((hidden_size, hidden_size))
        layer_dims.append((hidden_size, output_size))

    weights, biases = [], []
    for (fan_in, fan_out) in layer_dims:
        key, wk, bk = jax.random.split(key, 3)
        bound = 1.0 / jnp.sqrt(fan_in)  # matches PyTorch Linear default range
        # stored as [in, out] (transposed relative to PyTorch's [out, in])
        w = jax.random.uniform(wk, (fan_in, fan_out), dtype, -bound, bound)
        b = jax.random.uniform(bk, (fan_out,), dtype, -bound, bound)
        weights.append(w)
        biases.append(b)
    return weights, biases


def mlp_reference(x, weights, biases):
    h = x
    for w, b in zip(weights, biases):
        h = h @ w + b
    return h


if __name__ == "__main__":
    # Small shapes consistent with the module's forward.
    batch = 8
    input_size = 16
    hidden_size = 32
    num_hidden_layers = 2
    output_size = 8

    key = jax.random.PRNGKey(0)
    key, xk = jax.random.split(key)
    x = jax.random.normal(xk, (batch, input_size), jnp.float32)

    weights, biases = init_mlp_params(
        key, input_size, hidden_size, num_hidden_layers, output_size)

    out = mlp_forward(x, weights, biases)
    out = jax.block_until_ready(out)

    ref = mlp_reference(x, weights, biases)
    assert out.shape == (batch, output_size)
    assert jnp.allclose(out, ref, atol=1e-5, rtol=1e-5), "mismatch vs reference"

    # Second check: non-trivial batch tiling + padding path (grid > 1).
    key, xk2 = jax.random.split(key)
    x2 = jax.random.normal(xk2, (40, input_size), jnp.float32)
    out2 = jax.block_until_ready(mlp_forward(x2, weights, biases, block_batch=16))
    ref2 = mlp_reference(x2, weights, biases)
    assert out2.shape == (40, output_size)
    assert jnp.allclose(out2, ref2, atol=1e-5, rtol=1e-5), "mismatch vs reference (tiled)"

    print("KERNEL_OK")
</pallas_src>

<mosaic_0001>
module attributes {stable_mosaic.version = 11 : i64} {
  func.func @kernel(%arg0: i32, %arg1: memref<8x128xf32, #tpu.memory_space<vmem>>, %arg2: memref<128x128xf32, #tpu.memory_space<vmem>>, %arg3: memref<1x128xf32, #tpu.memory_space<vmem>>, %arg4: memref<128x128xf32, #tpu.memory_space<vmem>>, %arg5: memref<1x128xf32, #tpu.memory_space<vmem>>, %arg6: memref<128x128xf32, #tpu.memory_space<vmem>>, %arg7: memref<1x128xf32, #tpu.memory_space<vmem>>, %arg8: memref<8x128xf32, #tpu.memory_space<vmem>>) attributes {dimension_semantics = [#tpu.dimension_semantics<parallel>], iteration_bounds = array<i64: 1>, scalar_prefetch = 0 : i64, scratch_operands = 0 : i64, tpu.core_type = #tpu.core_type<tc>, window_params = [{transform_indices = @transform_0, window_bounds = array<i64: 8, 128>}, {pipeline_mode = #tpu.pipeline_mode<synchronous>, transform_indices = @transform_1, window_bounds = array<i64: 128, 128>}, {pipeline_mode = #tpu.pipeline_mode<synchronous>, transform_indices = @transform_2, window_bounds = array<i64: 1, 128>}, {pipeline_mode = #tpu.pipeline_mode<synchronous>, transform_indices = @transform_3, window_bounds = array<i64: 128, 128>}, {pipeline_mode = #tpu.pipeline_mode<synchronous>, transform_indices = @transform_4, window_bounds = array<i64: 1, 128>}, {pipeline_mode = #tpu.pipeline_mode<synchronous>, transform_indices = @transform_5, window_bounds = array<i64: 128, 128>}, {pipeline_mode = #tpu.pipeline_mode<synchronous>, transform_indices = @transform_6, window_bounds = array<i64: 1, 128>}, {transform_indices = @transform_7, window_bounds = array<i64: 8, 128>}]} {
    %c0 = arith.constant 0 : index
    %c0_0 = arith.constant 0 : index
    %0 = vector.load %arg1[%c0, %c0_0] : memref<8x128xf32, #tpu.memory_space<vmem>>, vector<8x128xf32>
    %c0_1 = arith.constant 0 : index
    %c0_2 = arith.constant 0 : index
    %1 = vector.load %arg2[%c0_1, %c0_2] : memref<128x128xf32, #tpu.memory_space<vmem>>, vector<128x128xf32>
    %c0_3 = arith.constant 0 : index
    %c0_4 = arith.constant 0 : index
    %2 = vector.load %arg3[%c0_3, %c0_4] : memref<1x128xf32, #tpu.memory_space<vmem>>, vector<1x128xf32>
    %cst = arith.constant dense<0.000000e+00> : vector<8x128xf32>
    %3 = tpu.matmul %0, %1, %cst {dimension_numbers = #tpu.dot_dimension_numbers<[1], [0], [0], [1], [0, 0, 1, 1], [], []>} : vector<8x128xf32>, vector<128x128xf32>, vector<8x128xf32> -> vector<8x128xf32>
    %4 = vector.broadcast %2 : vector<1x128xf32> to vector<8x128xf32>
    %5 = arith.addf %3, %4 : vector<8x128xf32>
    %c0_5 = arith.constant 0 : index
    %c0_6 = arith.constant 0 : index
    %6 = vector.load %arg4[%c0_5, %c0_6] : memref<128x128xf32, #tpu.memory_space<vmem>>, vector<128x128xf32>
    %c0_7 = arith.constant 0 : index
    %c0_8 = arith.constant 0 : index
    %7 = vector.load %arg5[%c0_7, %c0_8] : memref<1x128xf32, #tpu.memory_space<vmem>>, vector<1x128xf32>
    %cst_9 = arith.constant dense<0.000000e+00> : vector<8x128xf32>
    %8 = tpu.matmul %5, %6, %cst_9 {dimension_numbers = #tpu.dot_dimension_numbers<[1], [0], [0], [1], [0, 0, 1, 1], [], []>} : vector<8x128xf32>, vector<128x128xf32>, vector<8x128xf32> -> vector<8x128xf32>
    %9 = vector.broadcast %7 : vector<1x128xf32> to vector<8x128xf32>
    %10 = arith.addf %8, %9 : vector<8x128xf32>
    %c0_10 = arith.constant 0 : index
    %c0_11 = arith.constant 0 : index
    %11 = vector.load %arg6[%c0_10, %c0_11] : memref<128x128xf32, #tpu.memory_space<vmem>>, vector<128x128xf32>
    %c0_12 = arith.constant 0 : index
    %c0_13 = arith.constant 0 : index
    %12 = vector.load %arg7[%c0_12, %c0_13] : memref<1x128xf32, #tpu.memory_space<vmem>>, vector<1x128xf32>
    %cst_14 = arith.constant dense<0.000000e+00> : vector<8x128xf32>
    %13 = tpu.matmul %10, %11, %cst_14 {dimension_numbers = #tpu.dot_dimension_numbers<[1], [0], [0], [1], [0, 0, 1, 1], [], []>} : vector<8x128xf32>, vector<128x128xf32>, vector<8x128xf32> -> vector<8x128xf32>
    %14 = vector.broadcast %12 : vector<1x128xf32> to vector<8x128xf32>
    %15 = arith.addf %13, %14 : vector<8x128xf32>
    %c0_15 = arith.constant 0 : index
    %c0_16 = arith.constant 0 : index
    %16 = vector.load %arg8[%c0_15, %c0_16] : memref<8x128xf32, #tpu.memory_space<vmem>>, vector<8x128xf32>
    tpu.vector_store %arg8[%c0_15, %c0_16], %15 {strides = array<i32>} : memref<8x128xf32, #tpu.memory_space<vmem>>, vector<8x128xf32>,
    return
  }
  func.func @transform_0(%arg0: i32) -> (i32, i32) {
    %c0_i32 = arith.constant 0 : i32
    %c0_i32_0 = arith.constant 0 : i32
    return %arg0, %c0_i32 : i32, i32
  }
  func.func @transform_1(%arg0: i32) -> (i32, i32) {
    %c0_i32 = arith.constant 0 : i32
    %c0_i32_0 = arith.constant 0 : i32
    %c0_i32_1 = arith.constant 0 : i32
    return %c0_i32, %c0_i32_0 : i32, i32
  }
  func.func @transform_2(%arg0: i32) -> (i32, i32) {
    %c0_i32 = arith.constant 0 : i32
    %c0_i32_0 = arith.constant 0 : i32
    %c0_i32_1 = arith.constant 0 : i32
    return %c0_i32, %c0_i32_0 : i32, i32
  }
  func.func @transform_3(%arg0: i32) -> (i32, i32) {
    %c0_i32 = arith.constant 0 : i32
    %c0_i32_0 = arith.constant 0 : i32
    %c0_i32_1 = arith.constant 0 : i32
    return %c0_i32, %c0_i32_0 : i32, i32
  }
  func.func @transform_4(%arg0: i32) -> (i32, i32) {
    %c0_i32 = arith.constant 0 : i32
    %c0_i32_0 = arith.constant 0 : i32
    %c0_i32_1 = arith.constant 0 : i32
    return %c0_i32, %c0_i32_0 : i32, i32
  }
  func.func @transform_5(%arg0: i32) -> (i32, i32) {
    %c0_i32 = arith.constant 0 : i32
    %c0_i32_0 = arith.constant 0 : i32
    %c0_i32_1 = arith.constant 0 : i32
    return %c0_i32, %c0_i32_0 : i32, i32
  }
  func.func @transform_6(%arg0: i32) -> (i32, i32) {
    %c0_i32 = arith.constant 0 : i32
    %c0_i32_0 = arith.constant 0 : i32
    %c0_i32_1 = arith.constant 0 : i32
    return %c0_i32, %c0_i32_0 : i32, i32
  }
  func.func @transform_7(%arg0: i32) -> (i32, i32) {
    %c0_i32 = arith.constant 0 : i32
    %c0_i32_0 = arith.constant 0 : i32
    return %arg0, %c0_i32 : i32, i32
  }
}

</mosaic_0001>

<llo_original>
// kernel: tpu_custom_call.1
$region0: #{tpu_custom_call.1}
  #allocation0 [shape = 'u32[]', space=smem, size = 0x4, offset = 0x4, fixed_abs, tag = 'smem constant byte address 0x4 - core index']
  #allocation1 [shape = 'u32[144,128]{1,0:T(1,128)}', space=vmem, size = 0x12000, scoped, tag = 'internal scratch']
  %s0 = inlined_call_operand.hbm [shape: f32[8,128], index: 0, kind: input, shape index: {}]
  %s1 = inlined_call_operand.hbm [shape: f32[128,128], index: 1, kind: input, shape index: {}]
  %s2 = inlined_call_operand.vmem [shape: f32[1,128], index: 2, kind: input, shape index: {}]
  %s3 = inlined_call_operand.hbm [shape: f32[128,128], index: 3, kind: input, shape index: {}]
  %s4 = inlined_call_operand.vmem [shape: f32[1,128], index: 4, kind: input, shape index: {}]
  %s5 = inlined_call_operand.hbm [shape: f32[128,128], index: 5, kind: input, shape index: {}]
  %s6 = inlined_call_operand.vmem [shape: f32[1,128], index: 6, kind: input, shape index: {}]
  %s7 = inlined_call_operand.hbm [shape: f32[8,128], index: 7, kind: output, shape index: {}]
  %s8 = sld [smem:[#allocation0]]
  $region54: #{tpu_custom_call.1} parent=0
    _
  %s10 = ssub.s32 1, %s8
  %s11 = scalar_select 0, %s10, %s8
  $region1: #{tpu_custom_call.1} parent=0
    #allocation2 [shape = 'u8[4096]{0}', space=vmem, size = 0x1000, scoped, tag = 'input window, operand 0, single buffered']
    #allocation3 [shape = 's32[1]{0}', space=sflag, size = 0x4, scoped, tag = 'scoped memory for tpu_custom_call.1']
    #allocation4 [shape = 's32[1]{0}', space=sflag, size = 0x4, scoped, tag = 'scoped memory for tpu_custom_call.1']
    #allocation5 [shape = 'u8[65536]{0}', space=vmem, size = 0x10000, scoped, tag = 'input window, operand 1, single buffered']
    #allocation6 [shape = 's32[1]{0}', space=sflag, size = 0x4, scoped, tag = 'scoped memory for tpu_custom_call.1']
    #allocation7 [shape = 'u8[65536]{0}', space=vmem, size = 0x10000, scoped, tag = 'input window, operand 3, single buffered']
    #allocation8 [shape = 'u8[65536]{0}', space=vmem, size = 0x10000, scoped, tag = 'input window, operand 5, single buffered']
    #allocation9 [shape = 's32[1]{0}', space=sflag, size = 0x4, scoped, tag = 'scoped memory for tpu_custom_call.1']
    #allocation10 [shape = 'u8[4096]{0}', space=vmem, size = 0x1000, scoped, tag = 'output window, operand 0, single buffered']
    %12 = vsyncpa [#allocation3], 0
    %13 = vsyncpa [#allocation6], 0
    %14 = vsyncpa [#allocation9], 0
    %15 = vsyncpa [#allocation4], 0
    // Predicated region
    $region2: #{tpu_custom_call.1} parent=1 // pred_check
      _
    $region3: #{tpu_custom_call.1} parent=1 // pred_check_branch
      %17 = sbr.rel (0) target = $region5
    $region4: #{tpu_custom_call.1} parent=1 // pred_region
      %s19 = ssub.s32 128, 128
      %20 = vsyncadd [#allocation3], %s19
      %s22 = sshll.u32 [#allocation2], 4
      %s23 = int_to_ptr.vmem [resolvable:$true] %s22
      %25 = dma.hbm_to_vmem [thread:$0]  %s0, 128, %s23, [#allocation3]
    $region5: #{tpu_custom_call.1} parent=1 // pred_fallthru
      _
    // Predicated region
    $region6: #{tpu_custom_call.1} parent=1 // pred_check
      _
    $region7: #{tpu_custom_call.1} parent=1 // pred_check_branch
      %27 = sbr.rel (0) target = $region9
    $region8: #{tpu_custom_call.1} parent=1 // pred_region
      %s29 = ssub.s32 2048, 2048
      %30 = vsyncadd [#allocation6], %s29
      %s31 = sshll.u32 [#allocation5], 4
      %s32 = int_to_ptr.vmem [resolvable:$true] %s31
      %37 = dma.hbm_to_vmem [thread:$0]  %s1, 2048, %s32, [#allocation6], 128, 128, 8
    $region9: #{tpu_custom_call.1} parent=1 // pred_fallthru
      _
    // Predicated region
    $region10: #{tpu_custom_call.1} parent=1 // pred_check
      _
    $region11: #{tpu_custom_call.1} parent=1 // pred_check_branch
      %39 = sbr.rel (0) target = $region13
    $region12: #{tpu_custom_call.1} parent=1 // pred_region
      _
    $region13: #{tpu_custom_call.1} parent=1 // pred_fallthru
      _
    // Predicated region
    $region14: #{tpu_custom_call.1} parent=1 // pred_check
      _
    $region15: #{tpu_custom_call.1} parent=1 // pred_check_branch
      %41 = sbr.rel (0) target = $region17
    $region16: #{tpu_custom_call.1} parent=1 // pred_region
      %s43 = ssub.s32 2048, 2048
      %44 = vsyncadd [#allocation6], %s43
      %s45 = sshll.u32 [#allocation7], 4
      %s46 = int_to_ptr.vmem [resolvable:$true] %s45
      %51 = dma.hbm_to_vmem [thread:$0]  %s3, 2048, %s46, [#allocation6], 128, 128, 8
    $region17: #{tpu_custom_call.1} parent=1 // pred_fallthru
      _
    // Predicated region
    $region18: #{tpu_custom_call.1} parent=1 // pred_check
      _
    $region19: #{tpu_custom_call.1} parent=1 // pred_check_branch
      %53 = sbr.rel (0) target = $region21
    $region20: #{tpu_custom_call.1} parent=1 // pred_region
      _
    $region21: #{tpu_custom_call.1} parent=1 // pred_fallthru
      _
    // Predicated region
    $region22: #{tpu_custom_call.1} parent=1 // pred_check
      _
    $region23: #{tpu_custom_call.1} parent=1 // pred_check_branch
      %55 = sbr.rel (0) target = $region25
    $region24: #{tpu_custom_call.1} parent=1 // pred_region
      %s57 = ssub.s32 2048, 2048
      %58 = vsyncadd [#allocation9], %s57
      %s59 = sshll.u32 [#allocation8], 4
      %s60 = int_to_ptr.vmem [resolvable:$true] %s59
      %65 = dma.hbm_to_vmem [thread:$0]  %s5, 2048, %s60, [#allocation9], 128, 128, 8
    $region25: #{tpu_custom_call.1} parent=1 // pred_fallthru
      _
    // Predicated region
    $region26: #{tpu_custom_call.1} parent=1 // pred_check
      _
    $region27: #{tpu_custom_call.1} parent=1 // pred_check_branch
      %67 = sbr.rel (0) target = $region29
    $region28: #{tpu_custom_call.1} parent=1 // pred_region
      _
    $region29: #{tpu_custom_call.1} parent=1 // pred_fallthru
      _
    // Predicated region
    $region30: #{tpu_custom_call.1} parent=1 // pred_check
      _
    $region31: #{tpu_custom_call.1} parent=1 // pred_check_branch
      %69 = sbr.rel (0) target = $region33
    $region32: #{tpu_custom_call.1} parent=1 // pred_region
      %70 = dma.done [#allocation3], 128
    $region33: #{tpu_custom_call.1} parent=1 // pred_fallthru
      _
    // Predicated region
    $region34: #{tpu_custom_call.1} parent=1 // pred_check
      _
    $region35: #{tpu_custom_call.1} parent=1 // pred_check_branch
      %72 = sbr.rel (0) target = $region37
    $region36: #{tpu_custom_call.1} parent=1 // pred_region
      %73 = dma.done [#allocation6], 2048
    $region37: #{tpu_custom_call.1} parent=1 // pred_fallthru
      _
    // Predicated region
    $region38: #{tpu_custom_call.1} parent=1 // pred_check
      _
    $region39: #{tpu_custom_call.1} parent=1 // pred_check_branch
      %75 = sbr.rel (0) target = $region41
    $region40: #{tpu_custom_call.1} parent=1 // pred_region
      %76 = dma.done [#allocation6], 2048
    $region41: #{tpu_custom_call.1} parent=1 // pred_fallthru
      _
    // Predicated region
    $region42: #{tpu_custom_call.1} parent=1 // pred_check
      _
    $region43: #{tpu_custom_call.1} parent=1 // pred_check_branch
      %78 = sbr.rel (0) target = $region45
    $region44: #{tpu_custom_call.1} parent=1 // pred_region
      %79 = dma.done [#allocation9], 2048
    $region45: #{tpu_custom_call.1} parent=1 // pred_fallthru
      _
    %v80 = vld [vmem:[#allocation2] sm:$0xff]
    %v81 = vld [vmem:[#allocation5] sm:$0xff]
    %v82 = vld [vmem:[#allocation5 + $0x8] sm:$0xff]
    %v83 = vld [vmem:[#allocation5 + $0x10] sm:$0xff]
    %v84 = vld [vmem:[#allocation5 + $0x18] sm:$0xff]
    %v85 = vld [vmem:[#allocation5 + $0x20] sm:$0xff]
    %v86 = vld [vmem:[#allocation5 + $0x28] sm:$0xff]
    %v87 = vld [vmem:[#allocation5 + $0x30] sm:$0xff]
    %v88 = vld [vmem:[#allocation5 + $0x38] sm:$0xff]
    %v89 = vld [vmem:[#allocation5 + $0x40] sm:$0xff]
    %v90 = vld [vmem:[#allocation5 + $0x48] sm:$0xff]
    %v91 = vld [vmem:[#allocation5 + $0x50] sm:$0xff]
    %v92 = vld [vmem:[#allocation5 + $0x58] sm:$0xff]
    %v93 = vld [vmem:[#allocation5 + $0x60] sm:$0xff]
    %v94 = vld [vmem:[#allocation5 + $0x68] sm:$0xff]
    %v95 = vld [vmem:[#allocation5 + $0x70] sm:$0xff]
    %v96 = vld [vmem:[#allocation5 + $0x78] sm:$0xff]
    %v97 = vld [vmem:[%s2] sm:$0x1]
    %v99 = vlaneseq
    %v100 = vshrl.u32 %v99, 7
    %v101 = vsub.s32 0, %v100
    %v102 = vrot.slane %v97, %v101
    %104 = vmatprep.subr.mxu0 0.0
    %105 = vmatpush1.msra.mxu0 %v96
    %106 = vmatprep.subr.mxu0 0.0
    %107 = vmatpush1.msra.mxu0 %v95
    %108 = vmatprep.subr.mxu0 0.0
    %109 = vmatpush1.msra.mxu0 %v94
    %110 = vmatprep.subr.mxu0 0.0
    %111 = vmatpush1.msra.mxu0 %v93
    %112 = vmatprep.subr.mxu0 0.0
    %113 = vmatpush1.msra.mxu0 %v92
    %114 = vmatprep.subr.mxu0 0.0
    %115 = vmatpush1.msra.mxu0 %v91
    %116 = vmatprep.subr.mxu0 0.0
    %117 = vmatpush1.msra.mxu0 %v90
    %118 = vmatprep.subr.mxu0 0.0
    %119 = vmatpush1.msra.mxu0 %v89
    %120 = vmatprep.subr.mxu0 0.0
    %121 = vmatpush1.msra.mxu0 %v88
    %122 = vmatprep.subr.mxu0 0.0
    %123 = vmatpush1.msra.mxu0 %v87
    %124 = vmatprep.subr.mxu0 0.0
    %125 = vmatpush1.msra.mxu0 %v86
    %126 = vmatprep.subr.mxu0 0.0
    %127 = vmatpush1.msra.mxu0 %v85
    %128 = vmatprep.subr.mxu0 0.0
    %129 = vmatpush1.msra.mxu0 %v84
    %130 = vmatprep.subr.mxu0 0.0
    %131 = vmatpush1.msra.mxu0 %v83
    %132 = vmatprep.subr.mxu0 0.0
    %133 = vmatpush1.msra.mxu0 %v82
    %134 = vmatprep.subr.mxu0 0.0
    %135 = vmatpush1.msra.mxu0 %v81
    %136 = vmatprep.subr.mxu0 0.0
    %137 = vmatpush2.msra.mxu0 0.0
    %138 = vmatprep.subr.mxu0 0.0
    %139 = vmatpush2.msra.mxu0 0.0
    %140 = vmatprep.subr.mxu0 0.0
    %141 = vmatpush2.msra.mxu0 0.0
    %142 = vmatprep.subr.mxu0 0.0
    %143 = vmatpush2.msra.mxu0 0.0
    %144 = vmatprep.subr.mxu0 0.0
    %145 = vmatpush2.msra.mxu0 0.0
    %146 = vmatprep.subr.mxu0 0.0
    %147 = vmatpush2.msra.mxu0 0.0
    %148 = vmatprep.subr.mxu0 0.0
    %149 = vmatpush2.msra.mxu0 0.0
    %150 = vmatprep.subr.mxu0 0.0
    %151 = vmatpush2.msra.mxu0 0.0
    %152 = vmatprep.subr.mxu0 0.0
    %153 = vmatpush2.msra.mxu0 0.0
    %154 = vmatprep.subr.mxu0 0.0
    %155 = vmatpush2.msra.mxu0 0.0
    %156 = vmatprep.subr.mxu0 0.0
    %157 = vmatpush2.msra.mxu0 0.0
    %158 = vmatprep.subr.mxu0 0.0
    %159 = vmatpush2.msra.mxu0 0.0
    %160 = vmatprep.subr.mxu0 0.0
    %161 = vmatpush2.msra.mxu0 0.0
    %162 = vmatprep.subr.mxu0 0.0
    %163 = vmatpush2.msra.mxu0 0.0
    %164 = vmatprep.subr.mxu0 0.0
    %165 = vmatpush2.msra.mxu0 0.0
    %166 = vmatprep.subr.mxu0 0.0
    %167 = vmatpush2.msra.mxu0 0.0
    %168 = vmatprep.mubr.f32.mxu0 0.0
    %169 = vmatmul.mubr.f32.gmra.mxu0 %v80
    %v170 = vpop.f32.mrf.mxu0
    %v171 = vadd.f32 %v102, %v170
    %v172 = vpop.f32.mrf.mxu0
    %173 = vdwg.mxu0
    %v174 = vld [vmem:[#allocation7] sm:$0xff]
    %v175 = vld [vmem:[#allocation7 + $0x8] sm:$0xff]
    %v176 = vld [vmem:[#allocation7 + $0x10] sm:$0xff]
    %v177 = vld [vmem:[#allocation7 + $0x18] sm:$0xff]
    %v178 = vld [vmem:[#allocation7 + $0x20] sm:$0xff]
    %v179 = vld [vmem:[#allocation7 + $0x28] sm:$0xff]
    %v180 = vld [vmem:[#allocation7 + $0x30] sm:$0xff]
    %v181 = vld [vmem:[#allocation7 + $0x38] sm:$0xff]
    %v182 = vld [vmem:[#allocation7 + $0x40] sm:$0xff]
    %v183 = vld [vmem:[#allocation7 + $0x48] sm:$0xff]
    %v184 = vld [vmem:[#allocation7 + $0x50] sm:$0xff]
    %v185 = vld [vmem:[#allocation7 + $0x58] sm:$0xff]
    %v186 = vld [vmem:[#allocation7 + $0x60] sm:$0xff]
    %v187 = vld [vmem:[#allocation7 + $0x68] sm:$0xff]
    %v188 = vld [vmem:[#allocation7 + $0x70] sm:$0xff]
    %v189 = vld [vmem:[#allocation7 + $0x78] sm:$0xff]
    %v190 = vld [vmem:[%s4] sm:$0x1]
    %v192 = vlaneseq
    %v193 = vshrl.u32 %v192, 7
    %v194 = vsub.s32 0, %v193
    %v195 = vrot.slane %v190, %v194
    %197 = vmatprep.subr.mxu0 0.0
    %198 = vmatpush1.msra.mxu0 %v189
    %199 = vmatprep.subr.mxu0 0.0
    %200 = vmatpush1.msra.mxu0 %v188
    %201 = vmatprep.subr.mxu0 0.0
    %202 = vmatpush1.msra.mxu0 %v187
    %203 = vmatprep.subr.mxu0 0.0
    %204 = vmatpush1.msra.mxu0 %v186
    %205 = vmatprep.subr.mxu0 0.0
    %206 = vmatpush1.msra.mxu0 %v185
    %207 = vmatprep.subr.mxu0 0.0
    %208 = vmatpush1.msra.mxu0 %v184
    %209 = vmatprep.subr.mxu0 0.0
    %210 = vmatpush1.msra.mxu0 %v183
    %211 = vmatprep.subr.mxu0 0.0
    %212 = vmatpush1.msra.mxu0 %v182
    %213 = vmatprep.subr.mxu0 0.0
    %214 = vmatpush1.msra.mxu0 %v181
    %215 = vmatprep.subr.mxu0 0.0
    %216 = vmatpush1.msra.mxu0 %v180
    %217 = vmatprep.subr.mxu0 0.0
    %218 = vmatpush1.msra.mxu0 %v179
    %219 = vmatprep.subr.mxu0 0.0
    %220 = vmatpush1.msra.mxu0 %v178
    %221 = vmatprep.subr.mxu0 0.0
    %222 = vmatpush1.msra.mxu0 %v177
    %223 = vmatprep.subr.mxu0 0.0
    %224 = vmatpush1.msra.mxu0 %v176
    %225 = vmatprep.subr.mxu0 0.0
    %226 = vmatpush1.msra.mxu0 %v175
    %227 = vmatprep.subr.mxu0 0.0
    %228 = vmatpush1.msra.mxu0 %v174
    %229 = vmatprep.subr.mxu0 0.0
    %230 = vmatpush2.msra.mxu0 0.0
    %231 = vmatprep.subr.mxu0 0.0
    %232 = vmatpush2.msra.mxu0 0.0
    %233 = vmatprep.subr.mxu0 0.0
    %234 = vmatpush2.msra.mxu0 0.0
    %235 = vmatprep.subr.mxu0 0.0
    %236 = vmatpush2.msra.mxu0 0.0
    %237 = vmatprep.subr.mxu0 0.0
    %238 = vmatpush2.msra.mxu0 0.0
    %239 = vmatprep.subr.mxu0 0.0
    %240 = vmatpush2.msra.mxu0 0.0
    %241 = vmatprep.subr.mxu0 0.0
    %242 = vmatpush2.msra.mxu0 0.0
    %243 = vmatprep.subr.mxu0 0.0
    %244 = vmatpush2.msra.mxu0 0.0
    %245 = vmatprep.subr.mxu0 0.0
    %246 = vmatpush2.msra.mxu0 0.0
    %247 = vmatprep.subr.mxu0 0.0
    %248 = vmatpush2.msra.mxu0 0.0
    %249 = vmatprep.subr.mxu0 0.0
    %250 = vmatpush2.msra.mxu0 0.0
    %251 = vmatprep.subr.mxu0 0.0
    %252 = vmatpush2.msra.mxu0 0.0
    %253 = vmatprep.subr.mxu0 0.0
    %254 = vmatpush2.msra.mxu0 0.0
    %255 = vmatprep.subr.mxu0 0.0
    %256 = vmatpush2.msra.mxu0 0.0
    %257 = vmatprep.subr.mxu0 0.0
    %258 = vmatpush2.msra.mxu0 0.0
    %259 = vmatprep.subr.mxu0 0.0
    %260 = vmatpush2.msra.mxu0 0.0
    %261 = vmatprep.mubr.f32.mxu0 0.0
    %262 = vmatmul.mubr.f32.gmra.mxu0 %v171
    %v263 = vpop.f32.mrf.mxu0
    %v264 = vadd.f32 %v195, %v263
    %v265 = vpop.f32.mrf.mxu0
    %266 = vdwg.mxu0
    %v267 = vld [vmem:[#allocation8] sm:$0xff]
    %v268 = vld [vmem:[#allocation8 + $0x8] sm:$0xff]
    %v269 = vld [vmem:[#allocation8 + $0x10] sm:$0xff]
    %v270 = vld [vmem:[#allocation8 + $0x18] sm:$0xff]
    %v271 = vld [vmem:[#allocation8 + $0x20] sm:$0xff]
    %v272 = vld [vmem:[#allocation8 + $0x28] sm:$0xff]
    %v273 = vld [vmem:[#allocation8 + $0x30] sm:$0xff]
    %v274 = vld [vmem:[#allocation8 + $0x38] sm:$0xff]
    %v275 = vld [vmem:[#allocation8 + $0x40] sm:$0xff]
    %v276 = vld [vmem:[#allocation8 + $0x48] sm:$0xff]
    %v277 = vld [vmem:[#allocation8 + $0x50] sm:$0xff]
    %v278 = vld [vmem:[#allocation8 + $0x58] sm:$0xff]
    %v279 = vld [vmem:[#allocation8 + $0x60] sm:$0xff]
    %v280 = vld [vmem:[#allocation8 + $0x68] sm:$0xff]
    %v281 = vld [vmem:[#allocation8 + $0x70] sm:$0xff]
    %v282 = vld [vmem:[#allocation8 + $0x78] sm:$0xff]
    %v283 = vld [vmem:[%s6] sm:$0x1]
    %v285 = vlaneseq
    %v286 = vshrl.u32 %v285, 7
    %v287 = vsub.s32 0, %v286
    %v288 = vrot.slane %v283, %v287
    %290 = vmatprep.subr.mxu0 0.0
    %291 = vmatpush1.msra.mxu0 %v282
    %292 = vmatprep.subr.mxu0 0.0
    %293 = vmatpush1.msra.mxu0 %v281
    %294 = vmatprep.subr.mxu0 0.0
    %295 = vmatpush1.msra.mxu0 %v280
    %296 = vmatprep.subr.mxu0 0.0
    %297 = vmatpush1.msra.mxu0 %v279
    %298 = vmatprep.subr.mxu0 0.0
    %299 = vmatpush1.msra.mxu0 %v278
    %300 = vmatprep.subr.mxu0 0.0
    %301 = vmatpush1.msra.mxu0 %v277
    %302 = vmatprep.subr.mxu0 0.0
    %303 = vmatpush1.msra.mxu0 %v276
    %304 = vmatprep.subr.mxu0 0.0
    %305 = vmatpush1.msra.mxu0 %v275
    %306 = vmatprep.subr.mxu0 0.0
    %307 = vmatpush1.msra.mxu0 %v274
    %308 = vmatprep.subr.mxu0 0.0
    %309 = vmatpush1.msra.mxu0 %v273
    %310 = vmatprep.subr.mxu0 0.0
    %311 = vmatpush1.msra.mxu0 %v272
    %312 = vmatprep.subr.mxu0 0.0
    %313 = vmatpush1.msra.mxu0 %v271
    %314 = vmatprep.subr.mxu0 0.0
    %315 = vmatpush1.msra.mxu0 %v270
    %316 = vmatprep.subr.mxu0 0.0
    %317 = vmatpush1.msra.mxu0 %v269
    %318 = vmatprep.subr.mxu0 0.0
    %319 = vmatpush1.msra.mxu0 %v268
    %320 = vmatprep.subr.mxu0 0.0
    %321 = vmatpush1.msra.mxu0 %v267
    %322 = vmatprep.subr.mxu0 0.0
    %323 = vmatpush2.msra.mxu0 0.0
    %324 = vmatprep.subr.mxu0 0.0
    %325 = vmatpush2.msra.mxu0 0.0
    %326 = vmatprep.subr.mxu0 0.0
    %327 = vmatpush2.msra.mxu0 0.0
    %328 = vmatprep.subr.mxu0 0.0
    %329 = vmatpush2.msra.mxu0 0.0
    %330 = vmatprep.subr.mxu0 0.0
    %331 = vmatpush2.msra.mxu0 0.0
    %332 = vmatprep.subr.mxu0 0.0
    %333 = vmatpush2.msra.mxu0 0.0
    %334 = vmatprep.subr.mxu0 0.0
    %335 = vmatpush2.msra.mxu0 0.0
    %336 = vmatprep.subr.mxu0 0.0
    %337 = vmatpush2.msra.mxu0 0.0
    %338 = vmatprep.subr.mxu0 0.0
    %339 = vmatpush2.msra.mxu0 0.0
    %340 = vmatprep.subr.mxu0 0.0
    %341 = vmatpush2.msra.mxu0 0.0
    %342 = vmatprep.subr.mxu0 0.0
    %343 = vmatpush2.msra.mxu0 0.0
    %344 = vmatprep.subr.mxu0 0.0
    %345 = vmatpush2.msra.mxu0 0.0
    %346 = vmatprep.subr.mxu0 0.0
    %347 = vmatpush2.msra.mxu0 0.0
    %348 = vmatprep.subr.mxu0 0.0
    %349 = vmatpush2.msra.mxu0 0.0
    %350 = vmatprep.subr.mxu0 0.0
    %351 = vmatpush2.msra.mxu0 0.0
    %352 = vmatprep.subr.mxu0 0.0
    %353 = vmatpush2.msra.mxu0 0.0
    %354 = vmatprep.mubr.f32.mxu0 0.0
    %355 = vmatmul.mubr.f32.gmra.mxu0 %v264
    %v356 = vpop.f32.mrf.mxu0
    %v357 = vadd.f32 %v288, %v356
    %v358 = vpop.f32.mrf.mxu0
    %359 = vdwg.mxu0
    %360 = vst [vmem:[#allocation10] sm:$0xff] %v357
    // Predicated region
    $region46: #{tpu_custom_call.1} parent=1 // pred_check
      _
    $region47: #{tpu_custom_call.1} parent=1 // pred_check_branch
      %362 = sbr.rel (0) target = $region49
    $region48: #{tpu_custom_call.1} parent=1 // pred_region
      %s364 = ssub.s32 128, 128
      %365 = vsyncadd [#allocation4], %s364
      %s367 = sshll.u32 [#allocation10], 4
      %s368 = int_to_ptr.vmem [resolvable:$true] %s367
      %370 = dma.vmem_to_hbm [thread:$0]  %s368, 128, %s7, [#allocation4]
    $region49: #{tpu_custom_call.1} parent=1 // pred_fallthru
      _
    // Predicated region
    $region50: #{tpu_custom_call.1} parent=1 // pred_check
      _
    $region51: #{tpu_custom_call.1} parent=1 // pred_check_branch
      %372 = sbr.rel (0) target = $region53
    $region52: #{tpu_custom_call.1} parent=1 // pred_region
      %373 = dma.done [#allocation4], 128
    $region53: #{tpu_custom_call.1} parent=1 // pred_fallthru
      _
    %374 = vsyncpa [#allocation3], 1
    %375 = vsyncpa [#allocation6], 1
    %376 = vsyncpa [#allocation9], 1
    %377 = vsyncpa [#allocation4], 1

</llo_original>
